<compile_context>
chip_gen: v5e
topology: v5e:2x2
jax: 0.10.0
libtpu: 0.0.40
codegen_flags: <defaults>
</compile_context>

<pallas_src>
import functools

import jax
import jax.numpy as jnp
from jax.experimental import pallas as pl
from jax.experimental.pallas import tpu as pltpu


# ---------------------------------------------------------------------------
# Helpers
# ---------------------------------------------------------------------------
def _round_up(x, m):
    return (x + m - 1) // m * m


def _vmem_capacity_bytes():
    try:
        return int(pltpu.get_tpu_info().vmem_capacity_bytes)
    except Exception:
        return 64 * 1024 * 1024   # conservative fallback: v7x has 64 MiB / TC


# sublane multiple by itemsize (f32 -> 8, bf16 -> 16, int8/fp8 -> 32)
_SUBLANE = {4: 8, 2: 16, 1: 32}


def _vmem_bytes(tm, mp, tk, itemsize, n_mp_f32_bufs):
    return (2 * tm * tk * itemsize          # X row tile   (double buffered)
            + 2 * tk * mp * itemsize        # X^T slab     (double buffered)
            + n_mp_f32_bufs * tm * mp * 4   # (tm, mp) f32 out / target / acc
            + 2 * 8 * 128 * 4)              # loss partial-sum slab


def _tile_plan(m, k, itemsize, budget):
    """Pick (tm, mp, tk, kp).

    Preference order (all within `budget` bytes of VMEM):
      1. nm == 1 (tm == Mp): the (tk, mp) X^T slab is read exactly once —
         this kernel is HBM-bound for typical style-loss sizes, so avoiding
         the nm-fold re-read dominates.
      2. Largest tk, preferring tk == full K (no K split at all, no per-step
         grid overhead); tk is always a multiple of 256 (full MXU depth).
    """
    sub = _SUBLANE[itemsize]
    mp_min = _round_up(max(m, 1), sub)
    kp_full = _round_up(max(k, 1), 256)

    tm_cands = [mp_min] + [_round_up(t, sub)
                           for t in (1024, 512, 256, 128) if t < mp_min]
    if sub < mp_min and sub not in tm_cands:
        tm_cands.append(sub)
    tk_cands = [kp_full] + [t for t in (8192, 4096, 2048, 1024, 512, 256)
                            if t < kp_full]

    # Budget against the worst case (loss kernel): 2 target buffers + 1 acc.
    for tm in tm_cands:
        mp = _round_up(m, tm)
        for tk in tk_cands:
            if _vmem_bytes(tm, mp, tk, itemsize, 3) <= budget:
                return tm, mp, tk, _round_up(k, tk)

    tm = sub
    return tm, _round_up(m, tm), 256, _round_up(k, 256)


def _pad2d(x, rows, cols):
    r, c = x.shape
    if r == rows and c == cols:
        return x
    return jnp.pad(x, ((0, rows - r), (0, cols - c)))


def _prep(feat_nchw, feed_bf16):
    """Flatten to (M, K), pick tiles, pad, build the HBM-side transpose."""
    n, c, h, w = feat_nchw.shape
    m, k = n * c, h * w
    denom = float(n * c * h * w)
    x = feat_nchw.reshape(m, k)
    if feed_bf16 and x.dtype == jnp.float32:
        x = x.astype(jnp.bfloat16)
    itemsize = jnp.dtype(x.dtype).itemsize

    cap = _vmem_capacity_bytes()
    budget = int(cap * 0.6)        # tile-planning budget (leave pipeline slack)
    vmem_limit = int(cap * 0.9)    # scoped limit handed to Mosaic

    tm, mp, tk, kp = _tile_plan(m, k, itemsize, budget)
    xp = _pad2d(x, mp, kp)
    xtp = xp.T                     # one XLA-side transpose; kernel RHS is (Kp, Mp)
    return m, denom, xp, xtp, (tm, mp, tk, kp), itemsize, vmem_limit


# ---------------------------------------------------------------------------
# Kernels
# ---------------------------------------------------------------------------
def _gram_kernel(x_rows_ref, xt_ref, g_ref, *, inv_denom):
    kstep = pl.program_id(1)

    @pl.when(kstep == 0)
    def _():
        g_ref[...] = jnp.zeros_like(g_ref)

    # (tm, tk) @ (tk, mp): contraction is lhs-last vs rhs-first — no in-kernel
    # transpose.  Accumulate directly into the resident f32 output block.
    g_ref[...] += jnp.dot(x_rows_ref[...], xt_ref[...],
                          preferred_element_type=jnp.float32)

    @pl.when(kstep == pl.num_programs(1) - 1)
    def _():
        g_ref[...] = g_ref[...] * inv_denom


def _style_loss_kernel(x_rows_ref, xt_ref, tgt_ref, psum_ref, acc_ref, *,
                       inv_denom):
    kstep = pl.program_id(1)

    @pl.when(kstep == 0)
    def _():
        acc_ref[...] = jnp.zeros_like(acc_ref)

    acc_ref[...] += jnp.dot(x_rows_ref[...], xt_ref[...],
                            preferred_element_type=jnp.float32)

    @pl.when(kstep == pl.num_programs(1) - 1)
    def _():
        diff = acc_ref[...] * inv_denom - tgt_ref[...]
        sq = jnp.sum(diff * diff)          # per-row-block squared-error sum
        # Lane-dense (8, 128) slab (unmasked store); combined outside.
        psum_ref[...] = jnp.full(psum_ref.shape, sq, dtype=jnp.float32)


# ---------------------------------------------------------------------------
# Wrappers
# ---------------------------------------------------------------------------
def gram_matrix_pallas(feat_nchw, *, feed_bf16=False):
    m, denom, xp, xtp, (tm, mp, tk, kp), itemsize, vmem_limit = _prep(
        feat_nchw, feed_bf16)
    nm, nk = mp // tm, kp // tk

    gp = pl.pallas_call(
        functools.partial(_gram_kernel, inv_denom=1.0 / denom),
        out_shape=jax.ShapeDtypeStruct((mp, mp), jnp.float32),
        grid_spec=pltpu.PrefetchScalarGridSpec(
            num_scalar_prefetch=0,
            grid=(nm, nk),
            in_specs=[
                pl.BlockSpec((tm, tk), lambda i, j: (i, j)),   # row tile of X
                pl.BlockSpec((tk, mp), lambda i, j: (j, 0)),   # X^T slab
            ],
            out_specs=pl.BlockSpec((tm, mp), lambda i, j: (i, 0)),
        ),
        compiler_params=pltpu.CompilerParams(
            dimension_semantics=("parallel", "arbitrary"),
            vmem_limit_bytes=vmem_limit),
        cost_estimate=pl.CostEstimate(
            flops=2 * mp * mp * kp,
            bytes_accessed=(mp * kp + nm * mp * kp) * itemsize + mp * mp * 4,
            transcendentals=0),
    )(xp, xtp)
    return gp[:m, :m]


def style_loss_forward(input_nchw, target_gram, *, feed_bf16=False):
    """Returns (input, loss) — matching StyleLoss.forward which returns the
    input unchanged and stashes the scalar MSE loss on the module."""
    m, denom, xp, xtp, (tm, mp, tk, kp), itemsize, vmem_limit = _prep(
        input_nchw, feed_bf16)
    nm, nk = mp // tm, kp // tk
    tgtp = _pad2d(target_gram.astype(jnp.float32), mp, mp)

    partials = pl.pallas_call(
        functools.partial(_style_loss_kernel, inv_denom=1.0 / denom),
        out_shape=jax.ShapeDtypeStruct((nm * 8, 128), jnp.float32),
        grid_spec=pltpu.PrefetchScalarGridSpec(
            num_scalar_prefetch=0,
            grid=(nm, nk),
            in_specs=[
                pl.BlockSpec((tm, tk), lambda i, j: (i, j)),   # row tile of X
                pl.BlockSpec((tk, mp), lambda i, j: (j, 0)),   # X^T slab
                pl.BlockSpec((tm, mp), lambda i, j: (i, 0)),   # target rows
            ],
            out_specs=pl.BlockSpec((8, 128), lambda i, j: (i, 0)),
            scratch_shapes=[pltpu.VMEM((tm, mp), jnp.float32)],
        ),
        compiler_params=pltpu.CompilerParams(
            dimension_semantics=("parallel", "arbitrary"),
            vmem_limit_bytes=vmem_limit),
        cost_estimate=pl.CostEstimate(
            flops=2 * mp * mp * kp,
            bytes_accessed=((mp * kp + nm * mp * kp) * itemsize
                            + mp * mp * 4 + nm * 8 * 128 * 4),
            transcendentals=0),
    )(xp, xtp, tgtp)

    # One partial squared-error sum per row block (replicated across its slab);
    # padded rows/cols contribute exactly zero, so divide by the true M*M.
    loss = jnp.sum(partials[0::8, 0]) / float(m * m)
    return input_nchw, loss


# ---------------------------------------------------------------------------
# Reference (pure JAX) for sanity checking
# ---------------------------------------------------------------------------
def _gram_ref(feat):
    n, c, h, w = feat.shape
    f = feat.reshape(n * c, h * w).astype(jnp.float32)
    return (f @ f.T) / (n * c * h * w)


def _style_loss_ref(inp, target_gram):
    g = _gram_ref(inp)
    return jnp.mean((g - target_gram) ** 2)


# ---------------------------------------------------------------------------
if __name__ == "__main__":
    key = jax.random.PRNGKey(0)
    k_tgt, k_in = jax.random.split(key)

    # Small shapes consistent with a conv feature map: N=2, C=4, H=W=16.
    target_feature = jax.random.normal(k_tgt, (2, 4, 16, 16), dtype=jnp.float32)
    x = jax.random.normal(k_in, (2, 4, 16, 16), dtype=jnp.float32)

    # __init__: precompute (detached) target gram matrix with the Pallas kernel.
    target_gram = gram_matrix_pallas(target_feature)

    # forward: gram of input + MSE loss against target, return input unchanged.
    out, loss = style_loss_forward(x, target_gram)
    out = jax.block_until_ready(out)
    loss = jax.block_until_ready(loss)

    # Sanity check against pure-JAX reference.
    ref_gram = _gram_ref(target_feature)
    ref_loss = _style_loss_ref(x, ref_gram)
    assert jnp.allclose(target_gram, ref_gram, rtol=1e-5, atol=1e-5)
    assert jnp.allclose(loss, ref_loss, rtol=1e-5, atol=1e-6), (loss, ref_loss)
    assert jnp.array_equal(out, x)

    print("KERNEL_OK")
</pallas_src>

<mosaic_0001>
module attributes {stable_mosaic.version = 11 : i64} {
  func.func @_gram_kernel(%arg0: i32, %arg1: i32, %arg2: memref<8x256xf32, #tpu.memory_space<vmem>>, %arg3: memref<256x8xf32, #tpu.memory_space<vmem>>, %arg4: memref<8x8xf32, #tpu.memory_space<vmem>>) attributes {dimension_semantics = [#tpu.dimension_semantics<parallel>, #tpu.dimension_semantics<arbitrary>], iteration_bounds = array<i64: 1, 1>, scalar_prefetch = 0 : i64, scratch_operands = 0 : i64, tpu.core_type = #tpu.core_type<tc>, window_params = [{transform_indices = @transform_0, window_bounds = array<i64: 8, 256>}, {transform_indices = @transform_1, window_bounds = array<i64: 256, 8>}, {transform_indices = @transform_2, window_bounds = array<i64: 8, 8>}]} {
    %c0_i32 = arith.constant 0 : i32
    %0 = arith.cmpi eq, %arg1, %c0_i32 : i32
    %1 = arith.extui %0 : i1 to i32
    %c0_i32_0 = arith.constant 0 : i32
    %2 = arith.cmpi ne, %1, %c0_i32_0 : i32
    scf.if %2 {
      %cst_10 = arith.constant 0.000000e+00 : f32
      %12 = vector.broadcast %cst_10 : f32 to vector<8x8xf32>
      %c0_11 = arith.constant 0 : index
      %c0_12 = arith.constant 0 : index
      %13 = vector.load %arg4[%c0_11, %c0_12] : memref<8x8xf32, #tpu.memory_space<vmem>>, vector<8x8xf32>
      tpu.vector_store %arg4[%c0_11, %c0_12], %12 {strides = array<i32>} : memref<8x8xf32, #tpu.memory_space<vmem>>, vector<8x8xf32>,
    } else {
    }
    %c0 = arith.constant 0 : index
    %c0_1 = arith.constant 0 : index
    %3 = vector.load %arg4[%c0, %c0_1] : memref<8x8xf32, #tpu.memory_space<vmem>>, vector<8x8xf32>
    %c0_2 = arith.constant 0 : index
    %c0_3 = arith.constant 0 : index
    %4 = vector.load %arg2[%c0_2, %c0_3] : memref<8x256xf32, #tpu.memory_space<vmem>>, vector<8x256xf32>
    %c0_4 = arith.constant 0 : index
    %c0_5 = arith.constant 0 : index
    %5 = vector.load %arg3[%c0_4, %c0_5] : memref<256x8xf32, #tpu.memory_space<vmem>>, vector<256x8xf32>
    %cst = arith.constant dense<0.000000e+00> : vector<8x8xf32>
    %6 = tpu.matmul %4, %5, %cst {dimension_numbers = #tpu.dot_dimension_numbers<[1], [0], [0], [1], [0, 0, 1, 1], [], []>} : vector<8x256xf32>, vector<256x8xf32>, vector<8x8xf32> -> vector<8x8xf32>
    %7 = arith.addf %3, %6 : vector<8x8xf32>
    %c0_6 = arith.constant 0 : index
    %c0_7 = arith.constant 0 : index
    %8 = vector.load %arg4[%c0_6, %c0_7] : memref<8x8xf32, #tpu.memory_space<vmem>>, vector<8x8xf32>
    tpu.vector_store %arg4[%c0_6, %c0_7], %7 {strides = array<i32>} : memref<8x8xf32, #tpu.memory_space<vmem>>, vector<8x8xf32>,
    %c0_i32_8 = arith.constant 0 : i32
    %9 = arith.cmpi eq, %arg1, %c0_i32_8 : i32
    %10 = arith.extui %9 : i1 to i32
    %c0_i32_9 = arith.constant 0 : i32
    %11 = arith.cmpi ne, %10, %c0_i32_9 : i32
    scf.if %11 {
      %c0_10 = arith.constant 0 : index
      %c0_11 = arith.constant 0 : index
      %12 = vector.load %arg4[%c0_10, %c0_11] : memref<8x8xf32, #tpu.memory_space<vmem>>, vector<8x8xf32>
      %cst_12 = arith.constant 4.8828125E-4 : f32
      %13 = vector.broadcast %cst_12 : f32 to vector<8x8xf32>
      %14 = arith.mulf %12, %13 : vector<8x8xf32>
      %c0_13 = arith.constant 0 : index
      %c0_14 = arith.constant 0 : index
      %15 = vector.load %arg4[%c0_13, %c0_14] : memref<8x8xf32, #tpu.memory_space<vmem>>, vector<8x8xf32>
      tpu.vector_store %arg4[%c0_13, %c0_14], %14 {strides = array<i32>} : memref<8x8xf32, #tpu.memory_space<vmem>>, vector<8x8xf32>,
    } else {
    }
    return
  }
  func.func @transform_0(%arg0: i32, %arg1: i32) -> (i32, i32) {
    %c0_i32 = arith.constant 0 : i32
    return %arg0, %arg1 : i32, i32
  }
  func.func @transform_1(%arg0: i32, %arg1: i32) -> (i32, i32) {
    %c0_i32 = arith.constant 0 : i32
    %c0_i32_0 = arith.constant 0 : i32
    return %arg1, %c0_i32 : i32, i32
  }
  func.func @transform_2(%arg0: i32, %arg1: i32) -> (i32, i32) {
    %c0_i32 = arith.constant 0 : i32
    %c0_i32_0 = arith.constant 0 : i32
    return %arg0, %c0_i32 : i32, i32
  }
}

</mosaic_0001>

<llo_original>
// kernel: tpu_custom_call.1
$region0: #{tpu_custom_call.1}
  #allocation0 [shape = 'u32[]', space=smem, size = 0x4, offset = 0x4, fixed_abs, tag = 'smem constant byte address 0x4 - core index']
  #allocation1 [shape = 'u32[72,128]{1,0:T(1,128)}', space=vmem, size = 0x9000, scoped, tag = 'internal scratch']
  %s0 = inlined_call_operand.vmem [shape: f32[8,256], index: 0, kind: input, shape index: {}]
  %s1 = inlined_call_operand.vmem [shape: f32[256,8], index: 1, kind: input, shape index: {}]
  %s2 = inlined_call_operand.hbm [shape: f32[8,8], index: 2, kind: output, shape index: {}]
  %s3 = sld [smem:[#allocation0]]
  $region26: #{tpu_custom_call.1} parent=0
    _
  %s5 = ssub.s32 1, %s3
  %s6 = scalar_select 0, %s5, %s3
  $region1: #{tpu_custom_call.1} parent=0
    #allocation2 [shape = 'u8[4096]{0}', space=vmem, size = 0x1000, scoped, tag = 'output window, operand 0, single buffered']
    #allocation3 [shape = 's32[1]{0}', space=sflag, size = 0x4, scoped, tag = 'scoped memory for tpu_custom_call.1']
    %7 = vsyncpa [#allocation3], 0
    // Predicated region
    $region2: #{tpu_custom_call.1} parent=1 // pred_check
      _
    $region3: #{tpu_custom_call.1} parent=1 // pred_check_branch
      %9 = sbr.rel (0) target = $region5
    $region4: #{tpu_custom_call.1} parent=1 // pred_region
      _
    $region5: #{tpu_custom_call.1} parent=1 // pred_fallthru
      _
    // Predicated region
    $region6: #{tpu_custom_call.1} parent=1 // pred_check
      _
    $region7: #{tpu_custom_call.1} parent=1 // pred_check_branch
      %11 = sbr.rel (0) target = $region9
    $region8: #{tpu_custom_call.1} parent=1 // pred_region
      _
    $region9: #{tpu_custom_call.1} parent=1 // pred_fallthru
      _
    %p12 = scmp.eq.s32.totalorder 0, 0
    // Predicated region
    $region10: #{tpu_custom_call.1} parent=1 // pred_check
      %p13 = pneg %p12
    $region11: #{tpu_custom_call.1} parent=1 // pred_check_branch
      %15 = sbr.rel (%p13) target = $region13
    $region12: #{tpu_custom_call.1} parent=1 // pred_region
      %vm16 = vcmask 64512
      %17 = vst.msk [vmem:[#allocation2] sm:$0xff] %vm16, 0.0
    $region13: #{tpu_custom_call.1} parent=1 // pred_fallthru
      _
    %v18 = vld [vmem:[#allocation2] sm:$0xff]
    %v19 = vld [vmem:[%s0] sm:$0xff]
    %v20 = vld [vmem:[%s0 + $0x8] sm:$0xff]
    %v21 = vld [vmem:[%s1] sm:$0xff]
    %v22 = vld [vmem:[%s1 + $0x8] sm:$0xff]
    %v23 = vld [vmem:[%s1 + $0x10] sm:$0xff]
    %v24 = vld [vmem:[%s1 + $0x18] sm:$0xff]
    %v25 = vld [vmem:[%s1 + $0x20] sm:$0xff]
    %v26 = vld [vmem:[%s1 + $0x28] sm:$0xff]
    %v27 = vld [vmem:[%s1 + $0x30] sm:$0xff]
    %v28 = vld [vmem:[%s1 + $0x38] sm:$0xff]
    %v29 = vld [vmem:[%s1 + $0x40] sm:$0xff]
    %v30 = vld [vmem:[%s1 + $0x48] sm:$0xff]
    %v31 = vld [vmem:[%s1 + $0x50] sm:$0xff]
    %v32 = vld [vmem:[%s1 + $0x58] sm:$0xff]
    %v33 = vld [vmem:[%s1 + $0x60] sm:$0xff]
    %v34 = vld [vmem:[%s1 + $0x68] sm:$0xff]
    %v35 = vld [vmem:[%s1 + $0x70] sm:$0xff]
    %v36 = vld [vmem:[%s1 + $0x78] sm:$0xff]
    %v37 = vld [vmem:[%s1 + $0x80] sm:$0xff]
    %v38 = vld [vmem:[%s1 + $0x88] sm:$0xff]
    %v39 = vld [vmem:[%s1 + $0x90] sm:$0xff]
    %v40 = vld [vmem:[%s1 + $0x98] sm:$0xff]
    %v41 = vld [vmem:[%s1 + $0xa0] sm:$0xff]
    %v42 = vld [vmem:[%s1 + $0xa8] sm:$0xff]
    %v43 = vld [vmem:[%s1 + $0xb0] sm:$0xff]
    %v44 = vld [vmem:[%s1 + $0xb8] sm:$0xff]
    %v45 = vld [vmem:[%s1 + $0xc0] sm:$0xff]
    %v46 = vld [vmem:[%s1 + $0xc8] sm:$0xff]
    %v47 = vld [vmem:[%s1 + $0xd0] sm:$0xff]
    %v48 = vld [vmem:[%s1 + $0xd8] sm:$0xff]
    %v49 = vld [vmem:[%s1 + $0xe0] sm:$0xff]
    %v50 = vld [vmem:[%s1 + $0xe8] sm:$0xff]
    %v51 = vld [vmem:[%s1 + $0xf0] sm:$0xff]
    %v52 = vld [vmem:[%s1 + $0xf8] sm:$0xff]
    %53 = vmatpush.msra.mxu0 %v36
    %54 = vmatpush.msra.mxu0 %v35
    %55 = vmatpush.msra.mxu0 %v34
    %56 = vmatpush.msra.mxu0 %v33
    %57 = vmatpush.msra.mxu0 %v32
    %58 = vmatpush.msra.mxu0 %v31
    %59 = vmatpush.msra.mxu0 %v30
    %60 = vmatpush.msra.mxu0 %v29
    %61 = vmatpush.msra.mxu0 %v28
    %62 = vmatpush.msra.mxu0 %v27
    %63 = vmatpush.msra.mxu0 %v26
    %64 = vmatpush.msra.mxu0 %v25
    %65 = vmatpush.msra.mxu0 %v24
    %66 = vmatpush.msra.mxu0 %v23
    %67 = vmatpush.msra.mxu0 %v22
    %68 = vmatpush.msra.mxu0 %v21
    %69 = vmatmul.f32.gmra.mxu0 %v19
    %v70 = vpop.f32.mrf.mxu0
    %v71 = vadd.f32 0.0, %v70
    %72 = vdwg.mxu0
    %73 = vmatpush.msra.mxu0 %v52
    %74 = vmatpush.msra.mxu0 %v51
    %75 = vmatpush.msra.mxu0 %v50
    %76 = vmatpush.msra.mxu0 %v49
    %77 = vmatpush.msra.mxu0 %v48
    %78 = vmatpush.msra.mxu0 %v47
    %79 = vmatpush.msra.mxu0 %v46
    %80 = vmatpush.msra.mxu0 %v45
    %81 = vmatpush.msra.mxu0 %v44
    %82 = vmatpush.msra.mxu0 %v43
    %83 = vmatpush.msra.mxu0 %v42
    %84 = vmatpush.msra.mxu0 %v41
    %85 = vmatpush.msra.mxu0 %v40
    %86 = vmatpush.msra.mxu0 %v39
    %87 = vmatpush.msra.mxu0 %v38
    %88 = vmatpush.msra.mxu0 %v37
    %89 = vmatmul.f32.gmra.mxu0 %v20
    %v90 = vpop.f32.mrf.mxu0
    %v91 = vadd.f32 %v71, %v90
    %92 = vdwg.mxu0
    %v93 = vadd.f32 %v18, %v91
    %vm94 = vcmask 64512
    %95 = vst.msk [vmem:[#allocation2] sm:$0xff] %vm94, %v93
    // Predicated region
    $region14: #{tpu_custom_call.1} parent=1 // pred_check
      %p96 = pneg %p12
    $region15: #{tpu_custom_call.1} parent=1 // pred_check_branch
      %98 = sbr.rel (%p96) target = $region17
    $region16: #{tpu_custom_call.1} parent=1 // pred_region
      %v99 = vld [vmem:[#allocation2] sm:$0xff]
      %v100 = vmul.f32 %v99, 0.00048828125
      %101 = vst.msk [vmem:[#allocation2] sm:$0xff] %vm94, %v100
    $region17: #{tpu_custom_call.1} parent=1 // pred_fallthru
      _
    // Predicated region
    $region18: #{tpu_custom_call.1} parent=1 // pred_check
      _
    $region19: #{tpu_custom_call.1} parent=1 // pred_check_branch
      %103 = sbr.rel (0) target = $region21
    $region20: #{tpu_custom_call.1} parent=1 // pred_region
      %105 = vsyncadd [#allocation3], 0
      %s107 = sshll.u32 [#allocation2], 4
      %s108 = int_to_ptr.vmem [resolvable:$true] %s107
      %s109 = sshll.u32 %s2, 4
      %s110 = int_to_ptr.hbm [resolvable:$true] %s109
      %112 = dma.vmem_to_hbm [thread:$0]  %s108, 128, %s110, [#allocation3]
    $region21: #{tpu_custom_call.1} parent=1 // pred_fallthru
      _
    // Predicated region
    $region22: #{tpu_custom_call.1} parent=1 // pred_check
      _
    $region23: #{tpu_custom_call.1} parent=1 // pred_check_branch
      %114 = sbr.rel (0) target = $region25
    $region24: #{tpu_custom_call.1} parent=1 // pred_region
      %116 = dma.done [#allocation3], 128
    $region25: #{tpu_custom_call.1} parent=1 // pred_fallthru
      _
    %117 = vsyncpa [#allocation3], 1

</llo_original>
